<compile_context>
chip_gen: v6e
topology: v6e:2x2x1
jax: 0.10.0
libtpu: 0.0.40
codegen_flags: <defaults>
</compile_context>

<pallas_src>
import jax
import jax.numpy as jnp
from jax.experimental import pallas as pl
from jax.experimental.pallas import tpu as pltpu


def _round_up(x, m):
    return (x + m - 1) // m * m


def _choose_tm(m, kp, npad):
    """Largest MXU-friendly M tile that fits a conservative VMEM budget.

    Budget ~24 MiB so the tiling also fits v7x's 64 MiB VMEM (32 MiB scoped
    default); v5e/v6e (128 MiB) fit trivially.  Keeps >= 2 grid steps when the
    problem is large enough to shard across v7x's two TensorCores.
    """
    budget = 24 * 1024 * 1024
    resident = 2 * (kp * npad * 2 + npad * 4)      # bf16 weights + f32 bias
    per_row = 2 * (kp * 2 + npad * 4)              # dbl-buffered bf16 A + f32 O
    cap = max(16, (budget - resident) // per_row)
    cap = max(16, min(512, (cap // 16) * 16))      # multiple of 16 (bf16 sublanes)
    mp8 = _round_up(m, 8)
    if mp8 <= cap:
        return mp8                                 # single full-M tile
    if mp8 < 2 * cap:
        return _round_up((mp8 + 1) // 2, 16)       # two roughly equal tiles
    return cap


def _vmem_limit_bytes(tm, kp, npad):
    footprint = (2 * tm * kp * 2        # A tiles, double-buffered, bf16
                 + 2 * kp * npad * 2    # weight block (x2, conservative)
                 + 2 * npad * 4         # bias
                 + 2 * tm * npad * 4)   # output tiles, double-buffered, f32
    return int(min(64 * 1024 * 1024, max(16 * 1024 * 1024, 2 * footprint)))


# ---------------------------------------------------------------------------
# Pallas kernel: fused  out = relu(A @ B + bias)
#   A:    (tm, Kp) bf16   im2col patches tile
#   B:    (Kp, Np) bf16   reshaped conv weights (VMEM-resident across grid)
#   bias: (1,  Np) f32
# MXU runs at bf16 rate; accumulation and epilogue are f32 (v5e-safe),
# single cast at the store.
# ---------------------------------------------------------------------------
def gemm_bias_relu_kernel(a_ref, b_ref, bias_ref, o_ref):
    acc = jnp.dot(a_ref[...], b_ref[...], preferred_element_type=jnp.float32)
    acc = acc + bias_ref[...]
    o_ref[...] = jnp.maximum(acc, 0.0).astype(o_ref.dtype)


def matmul_bias_relu(a, b, bias):
    """relu(a @ b + bias) on the MXU, bf16 inputs / f32 accumulation."""
    M, K = a.shape
    _, N = b.shape
    Kp = _round_up(K, 16)    # bf16 sublane packing on the weight operand
    Np = _round_up(N, 128)   # lane-dense output stores

    # jnp.pad (single fused pad) instead of zeros().at[].set(); cast GEMM
    # inputs to bf16 (zero K/N padding contributes 0 before the ReLU).
    a_p = jnp.pad(a, ((0, 0), (0, Kp - K))).astype(jnp.bfloat16)
    b_p = jnp.pad(b, ((0, Kp - K), (0, Np - N))).astype(jnp.bfloat16)
    bias_p = jnp.pad(bias.reshape(1, N).astype(jnp.float32),
                     ((0, 0), (0, Np - N)))

    tm = _choose_tm(M, Kp, Np)
    Mp = _round_up(M, tm)
    if Mp != M:
        a_p = jnp.pad(a_p, ((0, Mp - M), (0, 0)))

    out = pl.pallas_call(
        gemm_bias_relu_kernel,
        out_shape=jax.ShapeDtypeStruct((Mp, Np), jnp.float32),
        grid=(Mp // tm,),
        in_specs=[
            pl.BlockSpec((tm, Kp), lambda i: (i, 0)),   # patches tile
            pl.BlockSpec((Kp, Np), lambda i: (0, 0)),   # weights: resident
            pl.BlockSpec((1, Np), lambda i: (0, 0)),    # bias:    resident
        ],
        out_specs=pl.BlockSpec((tm, Np), lambda i: (i, 0)),
        compiler_params=pltpu.CompilerParams(
            dimension_semantics=("parallel",),
            vmem_limit_bytes=_vmem_limit_bytes(tm, Kp, Np),
        ),
    )(a_p, b_p, bias_p)
    return out[:M, :N]


# ---------------------------------------------------------------------------
# One backbone stage: conv3x3 stride 2 pad 1 + bias + ReLU (NHWC)
# im2col (pure-JAX glue, bf16) -> Pallas fused GEMM.
# ---------------------------------------------------------------------------
def conv3x3_s2_bias_relu(x_nhwc, w, b):
    # w: (Cout, Cin, 3, 3) in PyTorch layout; b: (Cout,)
    B, H, W, C = x_nhwc.shape
    Cout = w.shape[0]
    kh = kw = 3
    stride, pad = 2, 1

    Ho = (H + 2 * pad - kh) // stride + 1
    Wo = (W + 2 * pad - kw) // stride + 1

    # bf16 activations into the GEMM path (halves patch bytes); pad spatially.
    xp = jnp.pad(x_nhwc, ((0, 0), (pad, pad), (pad, pad), (0, 0)))
    xp = xp.astype(jnp.bfloat16)

    cols = []
    for i in range(kh):
        for j in range(kw):
            cols.append(
                xp[:, i:i + stride * Ho:stride, j:j + stride * Wo:stride, :])
    patches = jnp.concatenate(cols, axis=-1).reshape(B * Ho * Wo, kh * kw * C)

    # match im2col ordering (i, j, c) -> weight matrix (kh*kw*Cin, Cout)
    w_mat = jnp.transpose(w, (2, 3, 1, 0)).reshape(kh * kw * C, Cout)

    out = matmul_bias_relu(patches, w_mat, b)          # (M, Cout) f32
    return out.reshape(B, Ho, Wo, Cout)


# ---------------------------------------------------------------------------
# TimmModel.forward equivalent: run the backbone, return last feature (NCHW)
# ---------------------------------------------------------------------------
def timm_model_forward(x_nchw, params):
    x = jnp.transpose(x_nchw, (0, 2, 3, 1))  # NCHW -> NHWC for the kernel path
    features = []
    for (w, b) in params:
        x = conv3x3_s2_bias_relu(x, w, b)
        features.append(x)
    last = features[-1]                       # <- the `[-1]` in TimmModel.forward
    return jnp.transpose(last, (0, 3, 1, 2))  # back to NCHW (PyTorch convention)


def init_params(key, cin, channels=(8, 16, 32)):
    params = []
    c_prev = cin
    for idx, cout in enumerate(channels):
        k_w, k_b = jax.random.split(jax.random.fold_in(key, idx))
        w = 0.1 * jax.random.normal(k_w, (cout, c_prev, 3, 3), jnp.float32)
        b = 0.01 * jax.random.normal(k_b, (cout,), jnp.float32)
        params.append((w, b))
        c_prev = cout
    return params


if __name__ == "__main__":
    key = jax.random.PRNGKey(0)
    k_x, k_p = jax.random.split(key)

    x = jax.random.normal(k_x, (2, 4, 16, 16), jnp.float32)  # NCHW input
    params = init_params(k_p, cin=4, channels=(8, 16, 32))

    fwd = jax.jit(timm_model_forward)
    out = fwd(x, params)
    out = jax.block_until_ready(out)

    assert out.shape == (2, 32, 2, 2), out.shape
    print("KERNEL_OK")
</pallas_src>

<mosaic_0001>
module attributes {stable_mosaic.version = 11 : i64} {
  func.func @gemm_bias_relu_kernel(%arg0: i32, %arg1: memref<128x48xbf16, #tpu.memory_space<vmem>>, %arg2: memref<48x128xbf16, #tpu.memory_space<vmem>>, %arg3: memref<1x128xf32, #tpu.memory_space<vmem>>, %arg4: memref<128x128xf32, #tpu.memory_space<vmem>>) attributes {dimension_semantics = [#tpu.dimension_semantics<parallel>], iteration_bounds = array<i64: 1>, scalar_prefetch = 0 : i64, scratch_operands = 0 : i64, tpu.core_type = #tpu.core_type<tc>, window_params = [{transform_indices = @transform_0, window_bounds = array<i64: 128, 48>}, {pipeline_mode = #tpu.pipeline_mode<synchronous>, transform_indices = @transform_1, window_bounds = array<i64: 48, 128>}, {pipeline_mode = #tpu.pipeline_mode<synchronous>, transform_indices = @transform_2, window_bounds = array<i64: 1, 128>}, {transform_indices = @transform_3, window_bounds = array<i64: 128, 128>}]} {
    %c0 = arith.constant 0 : index
    %c0_0 = arith.constant 0 : index
    %0 = vector.load %arg1[%c0, %c0_0] : memref<128x48xbf16, #tpu.memory_space<vmem>>, vector<128x48xbf16>
    %c0_1 = arith.constant 0 : index
    %c0_2 = arith.constant 0 : index
    %1 = vector.load %arg2[%c0_1, %c0_2] : memref<48x128xbf16, #tpu.memory_space<vmem>>, vector<48x128xbf16>
    %cst = arith.constant dense<0.000000e+00> : vector<128x128xf32>
    %2 = tpu.matmul %0, %1, %cst {dimension_numbers = #tpu.dot_dimension_numbers<[1], [0], [0], [1], [0, 0, 1, 1], [], []>} : vector<128x48xbf16>, vector<48x128xbf16>, vector<128x128xf32> -> vector<128x128xf32>
    %c0_3 = arith.constant 0 : index
    %c0_4 = arith.constant 0 : index
    %3 = vector.load %arg3[%c0_3, %c0_4] : memref<1x128xf32, #tpu.memory_space<vmem>>, vector<1x128xf32>
    %4 = vector.broadcast %3 : vector<1x128xf32> to vector<128x128xf32>
    %5 = arith.addf %2, %4 : vector<128x128xf32>
    %cst_5 = arith.constant 0.000000e+00 : f32
    %6 = vector.broadcast %cst_5 : f32 to vector<128x128xf32>
    %7 = arith.maximumf %5, %6 : vector<128x128xf32>
    %c0_6 = arith.constant 0 : index
    %c0_7 = arith.constant 0 : index
    %8 = vector.load %arg4[%c0_6, %c0_7] : memref<128x128xf32, #tpu.memory_space<vmem>>, vector<128x128xf32>
    tpu.vector_store %arg4[%c0_6, %c0_7], %7 {strides = array<i32>} : memref<128x128xf32, #tpu.memory_space<vmem>>, vector<128x128xf32>,
    return
  }
  func.func @transform_0(%arg0: i32) -> (i32, i32) {
    %c0_i32 = arith.constant 0 : i32
    %c0_i32_0 = arith.constant 0 : i32
    return %arg0, %c0_i32 : i32, i32
  }
  func.func @transform_1(%arg0: i32) -> (i32, i32) {
    %c0_i32 = arith.constant 0 : i32
    %c0_i32_0 = arith.constant 0 : i32
    %c0_i32_1 = arith.constant 0 : i32
    return %c0_i32, %c0_i32_0 : i32, i32
  }
  func.func @transform_2(%arg0: i32) -> (i32, i32) {
    %c0_i32 = arith.constant 0 : i32
    %c0_i32_0 = arith.constant 0 : i32
    %c0_i32_1 = arith.constant 0 : i32
    return %c0_i32, %c0_i32_0 : i32, i32
  }
  func.func @transform_3(%arg0: i32) -> (i32, i32) {
    %c0_i32 = arith.constant 0 : i32
    %c0_i32_0 = arith.constant 0 : i32
    return %arg0, %c0_i32 : i32, i32
  }
}

module attributes {stable_mosaic.version = 11 : i64} {
  func.func @gemm_bias_relu_kernel(%arg0: i32, %arg1: memref<32x80xbf16, #tpu.memory_space<vmem>>, %arg2: memref<80x128xbf16, #tpu.memory_space<vmem>>, %arg3: memref<1x128xf32, #tpu.memory_space<vmem>>, %arg4: memref<32x128xf32, #tpu.memory_space<vmem>>) attributes {dimension_semantics = [#tpu.dimension_semantics<parallel>], iteration_bounds = array<i64: 1>, scalar_prefetch = 0 : i64, scratch_operands = 0 : i64, tpu.core_type = #tpu.core_type<tc>, window_params = [{transform_indices = @transform_0, window_bounds = array<i64: 32, 80>}, {pipeline_mode = #tpu.pipeline_mode<synchronous>, transform_indices = @transform_1, window_bounds = array<i64: 80, 128>}, {pipeline_mode = #tpu.pipeline_mode<synchronous>, transform_indices = @transform_2, window_bounds = array<i64: 1, 128>}, {transform_indices = @transform_3, window_bounds = array<i64: 32, 128>}]} {
    %c0 = arith.constant 0 : index
    %c0_0 = arith.constant 0 : index
    %0 = vector.load %arg1[%c0, %c0_0] : memref<32x80xbf16, #tpu.memory_space<vmem>>, vector<32x80xbf16>
    %c0_1 = arith.constant 0 : index
    %c0_2 = arith.constant 0 : index
    %1 = vector.load %arg2[%c0_1, %c0_2] : memref<80x128xbf16, #tpu.memory_space<vmem>>, vector<80x128xbf16>
    %cst = arith.constant dense<0.000000e+00> : vector<32x128xf32>
    %2 = tpu.matmul %0, %1, %cst {dimension_numbers = #tpu.dot_dimension_numbers<[1], [0], [0], [1], [0, 0, 1, 1], [], []>} : vector<32x80xbf16>, vector<80x128xbf16>, vector<32x128xf32> -> vector<32x128xf32>
    %c0_3 = arith.constant 0 : index
    %c0_4 = arith.constant 0 : index
    %3 = vector.load %arg3[%c0_3, %c0_4] : memref<1x128xf32, #tpu.memory_space<vmem>>, vector<1x128xf32>
    %4 = vector.broadcast %3 : vector<1x128xf32> to vector<32x128xf32>
    %5 = arith.addf %2, %4 : vector<32x128xf32>
    %cst_5 = arith.constant 0.000000e+00 : f32
    %6 = vector.broadcast %cst_5 : f32 to vector<32x128xf32>
    %7 = arith.maximumf %5, %6 : vector<32x128xf32>
    %c0_6 = arith.constant 0 : index
    %c0_7 = arith.constant 0 : index
    %8 = vector.load %arg4[%c0_6, %c0_7] : memref<32x128xf32, #tpu.memory_space<vmem>>, vector<32x128xf32>
    tpu.vector_store %arg4[%c0_6, %c0_7], %7 {strides = array<i32>} : memref<32x128xf32, #tpu.memory_space<vmem>>, vector<32x128xf32>,
    return
  }
  func.func @transform_0(%arg0: i32) -> (i32, i32) {
    %c0_i32 = arith.constant 0 : i32
    %c0_i32_0 = arith.constant 0 : i32
    return %arg0, %c0_i32 : i32, i32
  }
  func.func @transform_1(%arg0: i32) -> (i32, i32) {
    %c0_i32 = arith.constant 0 : i32
    %c0_i32_0 = arith.constant 0 : i32
    %c0_i32_1 = arith.constant 0 : i32
    return %c0_i32, %c0_i32_0 : i32, i32
  }
  func.func @transform_2(%arg0: i32) -> (i32, i32) {
    %c0_i32 = arith.constant 0 : i32
    %c0_i32_0 = arith.constant 0 : i32
    %c0_i32_1 = arith.constant 0 : i32
    return %c0_i32, %c0_i32_0 : i32, i32
  }
  func.func @transform_3(%arg0: i32) -> (i32, i32) {
    %c0_i32 = arith.constant 0 : i32
    %c0_i32_0 = arith.constant 0 : i32
    return %arg0, %c0_i32 : i32, i32
  }
}

module attributes {stable_mosaic.version = 11 : i64} {
  func.func @gemm_bias_relu_kernel(%arg0: i32, %arg1: memref<8x144xbf16, #tpu.memory_space<vmem>>, %arg2: memref<144x128xbf16, #tpu.memory_space<vmem>>, %arg3: memref<1x128xf32, #tpu.memory_space<vmem>>, %arg4: memref<8x128xf32, #tpu.memory_space<vmem>>) attributes {dimension_semantics = [#tpu.dimension_semantics<parallel>], iteration_bounds = array<i64: 1>, scalar_prefetch = 0 : i64, scratch_operands = 0 : i64, tpu.core_type = #tpu.core_type<tc>, window_params = [{transform_indices = @transform_0, window_bounds = array<i64: 8, 144>}, {pipeline_mode = #tpu.pipeline_mode<synchronous>, transform_indices = @transform_1, window_bounds = array<i64: 144, 128>}, {pipeline_mode = #tpu.pipeline_mode<synchronous>, transform_indices = @transform_2, window_bounds = array<i64: 1, 128>}, {transform_indices = @transform_3, window_bounds = array<i64: 8, 128>}]} {
    %c0 = arith.constant 0 : index
    %c0_0 = arith.constant 0 : index
    %0 = vector.load %arg1[%c0, %c0_0] : memref<8x144xbf16, #tpu.memory_space<vmem>>, vector<8x144xbf16>
    %c0_1 = arith.constant 0 : index
    %c0_2 = arith.constant 0 : index
    %1 = vector.load %arg2[%c0_1, %c0_2] : memref<144x128xbf16, #tpu.memory_space<vmem>>, vector<144x128xbf16>
    %cst = arith.constant dense<0.000000e+00> : vector<8x128xf32>
    %2 = tpu.matmul %0, %1, %cst {dimension_numbers = #tpu.dot_dimension_numbers<[1], [0], [0], [1], [0, 0, 1, 1], [], []>} : vector<8x144xbf16>, vector<144x128xbf16>, vector<8x128xf32> -> vector<8x128xf32>
    %c0_3 = arith.constant 0 : index
    %c0_4 = arith.constant 0 : index
    %3 = vector.load %arg3[%c0_3, %c0_4] : memref<1x128xf32, #tpu.memory_space<vmem>>, vector<1x128xf32>
    %4 = vector.broadcast %3 : vector<1x128xf32> to vector<8x128xf32>
    %5 = arith.addf %2, %4 : vector<8x128xf32>
    %cst_5 = arith.constant 0.000000e+00 : f32
    %6 = vector.broadcast %cst_5 : f32 to vector<8x128xf32>
    %7 = arith.maximumf %5, %6 : vector<8x128xf32>
    %c0_6 = arith.constant 0 : index
    %c0_7 = arith.constant 0 : index
    %8 = vector.load %arg4[%c0_6, %c0_7] : memref<8x128xf32, #tpu.memory_space<vmem>>, vector<8x128xf32>
    tpu.vector_store %arg4[%c0_6, %c0_7], %7 {strides = array<i32>} : memref<8x128xf32, #tpu.memory_space<vmem>>, vector<8x128xf32>,
    return
  }
  func.func @transform_0(%arg0: i32) -> (i32, i32) {
    %c0_i32 = arith.constant 0 : i32
    %c0_i32_0 = arith.constant 0 : i32
    return %arg0, %c0_i32 : i32, i32
  }
  func.func @transform_1(%arg0: i32) -> (i32, i32) {
    %c0_i32 = arith.constant 0 : i32
    %c0_i32_0 = arith.constant 0 : i32
    %c0_i32_1 = arith.constant 0 : i32
    return %c0_i32, %c0_i32_0 : i32, i32
  }
  func.func @transform_2(%arg0: i32) -> (i32, i32) {
    %c0_i32 = arith.constant 0 : i32
    %c0_i32_0 = arith.constant 0 : i32
    %c0_i32_1 = arith.constant 0 : i32
    return %c0_i32, %c0_i32_0 : i32, i32
  }
  func.func @transform_3(%arg0: i32) -> (i32, i32) {
    %c0_i32 = arith.constant 0 : i32
    %c0_i32_0 = arith.constant 0 : i32
    return %arg0, %c0_i32 : i32, i32
  }
}

</mosaic_0001>

<llo_original>
// kernel: timm_model_forward.3
$region0: #{timm_model_forward.3}
  #allocation0 [shape = 'u32[]', space=smem, size = 0x4, offset = 0x4, fixed_abs, tag = 'smem constant byte address 0x4 - core index']
  #allocation1 [shape = 'u32[144,128]{1,0:T(1,128)}', space=vmem, size = 0x12000, scoped, tag = 'internal scratch']
  %s0 = inlined_call_operand.vmem [shape: bf16[128,48], index: 0, kind: input, shape index: {}]
  %s1 = inlined_call_operand.vmem [shape: bf16[48,128], index: 1, kind: input, shape index: {}]
  %s2 = inlined_call_operand.vmem [shape: f32[1,128], index: 2, kind: input, shape index: {}]
  %s3 = inlined_call_operand.vmem [shape: f32[128,128], index: 3, kind: output, shape index: {}]
  %s4 = sld [smem:[#allocation0]]
  $region22: #{timm_model_forward.3} parent=0
    _
  %s6 = ssub.s32 1, %s4
  %s7 = scalar_select 0, %s6, %s4
  // Predicated region
  $region2: #{timm_model_forward.3} parent=0 // pred_check
    _
  $region3: #{timm_model_forward.3} parent=0 // pred_check_branch
    %9 = sbr.rel (0) target = $region5
  $region4: #{timm_model_forward.3} parent=0 // pred_region
    _
  $region5: #{timm_model_forward.3} parent=0 // pred_fallthru
    _
  // Predicated region
  $region6: #{timm_model_forward.3} parent=0 // pred_check
    _
  $region7: #{timm_model_forward.3} parent=0 // pred_check_branch
    %11 = sbr.rel (0) target = $region9
  $region8: #{timm_model_forward.3} parent=0 // pred_region
    _
  $region9: #{timm_model_forward.3} parent=0 // pred_fallthru
    _
  // Predicated region
  $region10: #{timm_model_forward.3} parent=0 // pred_check
    _
  $region11: #{timm_model_forward.3} parent=0 // pred_check_branch
    %13 = sbr.rel (0) target = $region13
  $region12: #{timm_model_forward.3} parent=0 // pred_region
    _
  $region13: #{timm_model_forward.3} parent=0 // pred_fallthru
    _
  %v15 = vld [vmem:[%s0] sm:$0xf]
  %v16 = vld [vmem:[%s0 + $0x4] sm:$0xf]
  %v17 = vld [vmem:[%s0 + $0x8] sm:$0xf]
  %v18 = vld [vmem:[%s0 + $0xc] sm:$0xf]
  %v19 = vld [vmem:[%s0 + $0x10] sm:$0xf]
  %v20 = vld [vmem:[%s0 + $0x14] sm:$0xf]
  %v21 = vld [vmem:[%s0 + $0x18] sm:$0xf]
  %v22 = vld [vmem:[%s0 + $0x1c] sm:$0xf]
  %v23 = vld [vmem:[%s0 + $0x20] sm:$0xf]
  %v24 = vld [vmem:[%s0 + $0x24] sm:$0xf]
  %v25 = vld [vmem:[%s0 + $0x28] sm:$0xf]
  %v26 = vld [vmem:[%s0 + $0x2c] sm:$0xf]
  %v27 = vld [vmem:[%s0 + $0x30] sm:$0xf]
  %v28 = vld [vmem:[%s0 + $0x34] sm:$0xf]
  %v29 = vld [vmem:[%s0 + $0x38] sm:$0xf]
  %v30 = vld [vmem:[%s0 + $0x3c] sm:$0xf]
  %v31 = vld [vmem:[%s1] sm:$0xf]
  %v32 = vld [vmem:[%s1 + $0x4] sm:$0xf]
  %v33 = vld [vmem:[%s1 + $0x8] sm:$0xf]
  %v34 = vld [vmem:[%s1 + $0xc] sm:$0xf]
  %v35 = vld [vmem:[%s1 + $0x10] sm:$0xf]
  %v36 = vld [vmem:[%s1 + $0x14] sm:$0xf]
  %v37 = vld [vmem:[%s2] sm:$0x1]
  %v39 = vlaneseq
  %v40 = vshrl.u32 %v39, 7
  %v41 = vsub.s32 0, %v40
  %v42 = vrot.slane %v37, %v41
  %v60 = vunpack.c.l.b16 %v15
  %v61 = vunpack.c.l.b16 %v16
  %v62 = vunpack.c.l.b16 %v17
  %v63 = vunpack.c.l.b16 %v18
  %v64 = vunpack.c.l.b16 %v19
  %v65 = vunpack.c.l.b16 %v20
  %v66 = vunpack.c.l.b16 %v21
  %v67 = vunpack.c.l.b16 %v22
  %v68 = vunpack.c.l.b16 %v23
  %v69 = vunpack.c.l.b16 %v24
  %v70 = vunpack.c.l.b16 %v25
  %v71 = vunpack.c.l.b16 %v26
  %v72 = vunpack.c.l.b16 %v27
  %v73 = vunpack.c.l.b16 %v28
  %v74 = vunpack.c.l.b16 %v29
  %v75 = vunpack.c.l.b16 %v30
  %v76 = vpack.c.b16 %v61, %v60
  %v77 = vpack.c.b16 %v63, %v62
  %v78 = vpack.c.b16 %v65, %v64
  %v79 = vpack.c.b16 %v67, %v66
  %v80 = vpack.c.b16 %v69, %v68
  %v81 = vpack.c.b16 %v71, %v70
  %v82 = vpack.c.b16 %v73, %v72
  %v83 = vpack.c.b16 %v75, %v74
  %v90 = vunpack.c.l.b16 %v31
  %v91 = vunpack.c.l.b16 %v32
  %v92 = vunpack.c.l.b16 %v33
  %v93 = vunpack.c.l.b16 %v34
  %v94 = vunpack.c.l.b16 %v35
  %v95 = vunpack.c.l.b16 %v36
  %v96 = vpack.c.b16 %v91, %v90
  %v97 = vpack.c.b16 %v93, %v92
  %v98 = vpack.c.b16 %v95, %v94
  %vm102 = vcmask 392192
  %v104 = vsel %vm102, %v76, 0
  %v107 = vsel %vm102, %v77, 0
  %v110 = vsel %vm102, %v78, 0
  %v113 = vsel %vm102, %v79, 0
  %v116 = vsel %vm102, %v80, 0
  %v119 = vsel %vm102, %v81, 0
  %v122 = vsel %vm102, %v82, 0
  %v125 = vsel %vm102, %v83, 0
  %127 = vmatprep.subr.bf16.mxu0 0
  %128 = vmatpush1.bf16.msra.mxu0 0
  %129 = vmatprep.subr.bf16.mxu0 0
  %130 = vmatpush1.bf16.msra.mxu0 0
  %131 = vmatprep.subr.bf16.mxu0 0
  %132 = vmatpush1.bf16.msra.mxu0 0
  %133 = vmatprep.subr.bf16.mxu0 0
  %134 = vmatpush1.bf16.msra.mxu0 0
  %135 = vmatprep.subr.bf16.mxu0 0
  %136 = vmatpush1.bf16.msra.mxu0 0
  %137 = vmatprep.subr.bf16.mxu0 0
  %138 = vmatpush1.bf16.msra.mxu0 %v98
  %139 = vmatprep.subr.bf16.mxu0 0
  %140 = vmatpush1.bf16.msra.mxu0 %v97
  %141 = vmatprep.subr.bf16.mxu0 0
  %142 = vmatpush1.bf16.msra.mxu0 %v96
  %143 = vmatprep.subr.bf16.mxu0 0
  %144 = vmatpush2.bf16.msra.mxu0 0
  %145 = vmatprep.subr.bf16.mxu0 0
  %146 = vmatpush2.bf16.msra.mxu0 0
  %147 = vmatprep.subr.bf16.mxu0 0
  %148 = vmatpush2.bf16.msra.mxu0 0
  %149 = vmatprep.subr.bf16.mxu0 0
  %150 = vmatpush2.bf16.msra.mxu0 0
  %151 = vmatprep.subr.bf16.mxu0 0
  %152 = vmatpush2.bf16.msra.mxu0 0
  %153 = vmatprep.subr.bf16.mxu0 0
  %154 = vmatpush2.bf16.msra.mxu0 0
  %155 = vmatprep.subr.bf16.mxu0 0
  %156 = vmatpush2.bf16.msra.mxu0 0
  %157 = vmatprep.subr.bf16.mxu0 0
  %158 = vmatpush2.bf16.msra.mxu0 0
  %159 = vmatprep.mubr.bf16.mxu0 0
  %160 = vmatmul.mubr.bf16.gmra.mxu0 %v104
  %v161 = vpop.f32.mrf.mxu0
  %v162 = vadd.f32 %v42, %v161
  %v163 = vpop.f32.mrf.mxu0
  %v164 = vpop.f32.mrf.mxu0
  %v165 = vadd.f32 %v42, %v164
  %v166 = vpop.f32.mrf.mxu0
  %167 = vmatprep.mubr.bf16.mxu0 0
  %168 = vmatmul.mubr.bf16.gmra.mxu0 %v107
  %v169 = vpop.f32.mrf.mxu0
  %v170 = vadd.f32 %v42, %v169
  %v171 = vpop.f32.mrf.mxu0
  %v172 = vpop.f32.mrf.mxu0
  %v173 = vadd.f32 %v42, %v172
  %v174 = vpop.f32.mrf.mxu0
  %175 = vmatprep.mubr.bf16.mxu0 0
  %176 = vmatmul.mubr.bf16.gmra.mxu0 %v110
  %v177 = vpop.f32.mrf.mxu0
  %v178 = vadd.f32 %v42, %v177
  %v179 = vpop.f32.mrf.mxu0
  %v180 = vpop.f32.mrf.mxu0
  %v181 = vadd.f32 %v42, %v180
  %v182 = vpop.f32.mrf.mxu0
  %183 = vmatprep.mubr.bf16.mxu0 0
  %184 = vmatmul.mubr.bf16.gmra.mxu0 %v113
  %v185 = vpop.f32.mrf.mxu0
  %v186 = vadd.f32 %v42, %v185
  %v187 = vpop.f32.mrf.mxu0
  %v188 = vpop.f32.mrf.mxu0
  %v189 = vadd.f32 %v42, %v188
  %v190 = vpop.f32.mrf.mxu0
  %191 = vmatprep.mubr.bf16.mxu0 0
  %192 = vmatmul.mubr.bf16.gmra.mxu0 %v116
  %v193 = vpop.f32.mrf.mxu0
  %v194 = vadd.f32 %v42, %v193
  %v195 = vpop.f32.mrf.mxu0
  %v196 = vpop.f32.mrf.mxu0
  %v197 = vadd.f32 %v42, %v196
  %v198 = vpop.f32.mrf.mxu0
  %199 = vmatprep.mubr.bf16.mxu0 0
  %200 = vmatmul.mubr.bf16.gmra.mxu0 %v119
  %v201 = vpop.f32.mrf.mxu0
  %v202 = vadd.f32 %v42, %v201
  %v203 = vpop.f32.mrf.mxu0
  %v204 = vpop.f32.mrf.mxu0
  %v205 = vadd.f32 %v42, %v204
  %v206 = vpop.f32.mrf.mxu0
  %207 = vmatprep.mubr.bf16.mxu0 0
  %208 = vmatmul.mubr.bf16.gmra.mxu0 %v122
  %v209 = vpop.f32.mrf.mxu0
  %v210 = vadd.f32 %v42, %v209
  %v211 = vpop.f32.mrf.mxu0
  %v212 = vpop.f32.mrf.mxu0
  %v213 = vadd.f32 %v42, %v212
  %v214 = vpop.f32.mrf.mxu0
  %215 = vmatprep.mubr.bf16.mxu0 0
  %216 = vmatmul.mubr.bf16.gmra.mxu0 %v125
  %v217 = vpop.f32.mrf.mxu0
  %v218 = vadd.f32 %v42, %v217
  %v219 = vpop.f32.mrf.mxu0
  %v220 = vpop.f32.mrf.mxu0
  %v221 = vadd.f32 %v42, %v220
  %v222 = vpop.f32.mrf.mxu0
  %223 = vdwg.mxu0
  %v224 = vmax.f32 %v162, 0.0
  %v225 = vmax.f32 %v165, 0.0
  %v226 = vmax.f32 %v170, 0.0
  %v227 = vmax.f32 %v173, 0.0
  %v228 = vmax.f32 %v178, 0.0
  %v229 = vmax.f32 %v181, 0.0
  %v230 = vmax.f32 %v186, 0.0
  %v231 = vmax.f32 %v189, 0.0
  %v232 = vmax.f32 %v194, 0.0
  %v233 = vmax.f32 %v197, 0.0
  %v234 = vmax.f32 %v202, 0.0
  %v235 = vmax.f32 %v205, 0.0
  %v236 = vmax.f32 %v210, 0.0
  %v237 = vmax.f32 %v213, 0.0
  %v238 = vmax.f32 %v218, 0.0
  %v239 = vmax.f32 %v221, 0.0
  %240 = vst [vmem:[%s3] sm:$0xff] %v224
  %241 = vst [vmem:[%s3 + $0x8] sm:$0xff] %v225
  %242 = vst [vmem:[%s3 + $0x10] sm:$0xff] %v226
  %243 = vst [vmem:[%s3 + $0x18] sm:$0xff] %v227
  %244 = vst [vmem:[%s3 + $0x20] sm:$0xff] %v228
  %245 = vst [vmem:[%s3 + $0x28] sm:$0xff] %v229
  %246 = vst [vmem:[%s3 + $0x30] sm:$0xff] %v230
  %247 = vst [vmem:[%s3 + $0x38] sm:$0xff] %v231
  %248 = vst [vmem:[%s3 + $0x40] sm:$0xff] %v232
  %249 = vst [vmem:[%s3 + $0x48] sm:$0xff] %v233
  %250 = vst [vmem:[%s3 + $0x50] sm:$0xff] %v234
  %251 = vst [vmem:[%s3 + $0x58] sm:$0xff] %v235
  %252 = vst [vmem:[%s3 + $0x60] sm:$0xff] %v236
  %253 = vst [vmem:[%s3 + $0x68] sm:$0xff] %v237
  %254 = vst [vmem:[%s3 + $0x70] sm:$0xff] %v238
  %255 = vst [vmem:[%s3 + $0x78] sm:$0xff] %v239
  // Predicated region
  $region14: #{timm_model_forward.3} parent=0 // pred_check
    _
  $region15: #{timm_model_forward.3} parent=0 // pred_check_branch
    %257 = sbr.rel (0) target = $region17
  $region16: #{timm_model_forward.3} parent=0 // pred_region
    _
  $region17: #{timm_model_forward.3} parent=0 // pred_fallthru
    _
  // Predicated region
  $region18: #{timm_model_forward.3} parent=0 // pred_check
    _
  $region19: #{timm_model_forward.3} parent=0 // pred_check_branch
    %259 = sbr.rel (0) target = $region21
  $region20: #{timm_model_forward.3} parent=0 // pred_region
    _
  $region21: #{timm_model_forward.3} parent=0 // pred_fallthru
    _

// kernel: timm_model_forward.4
$region0: #{timm_model_forward.4}
  #allocation0 [shape = 'u32[]', space=smem, size = 0x4, offset = 0x4, fixed_abs, tag = 'smem constant byte address 0x4 - core index']
  #allocation1 [shape = 'u32[144,128]{1,0:T(1,128)}', space=vmem, size = 0x12000, scoped, tag = 'internal scratch']
  %s0 = inlined_call_operand.vmem [shape: bf16[32,80], index: 0, kind: input, shape index: {}]
  %s1 = inlined_call_operand.vmem [shape: bf16[80,128], index: 1, kind: input, shape index: {}]
  %s2 = inlined_call_operand.vmem [shape: f32[1,128], index: 2, kind: input, shape index: {}]
  %s3 = inlined_call_operand.vmem [shape: f32[32,128], index: 3, kind: output, shape index: {}]
  %s4 = sld [smem:[#allocation0]]
  $region22: #{timm_model_forward.4} parent=0
    _
  %s6 = ssub.s32 1, %s4
  %s7 = scalar_select 0, %s6, %s4
  // Predicated region
  $region2: #{timm_model_forward.4} parent=0 // pred_check
    _
  $region3: #{timm_model_forward.4} parent=0 // pred_check_branch
    %9 = sbr.rel (0) target = $region5
  $region4: #{timm_model_forward.4} parent=0 // pred_region
    _
  $region5: #{timm_model_forward.4} parent=0 // pred_fallthru
    _
  // Predicated region
  $region6: #{timm_model_forward.4} parent=0 // pred_check
    _
  $region7: #{timm_model_forward.4} parent=0 // pred_check_branch
    %11 = sbr.rel (0) target = $region9
  $region8: #{timm_model_forward.4} parent=0 // pred_region
    _
  $region9: #{timm_model_forward.4} parent=0 // pred_fallthru
    _
  // Predicated region
  $region10: #{timm_model_forward.4} parent=0 // pred_check
    _
  $region11: #{timm_model_forward.4} parent=0 // pred_check_branch
    %13 = sbr.rel (0) target = $region13
  $region12: #{timm_model_forward.4} parent=0 // pred_region
    _
  $region13: #{timm_model_forward.4} parent=0 // pred_fallthru
    _
  %v15 = vld [vmem:[%s0] sm:$0xf]
  %v16 = vld [vmem:[%s0 + $0x4] sm:$0xf]
  %v17 = vld [vmem:[%s0 + $0x8] sm:$0xf]
  %v18 = vld [vmem:[%s0 + $0xc] sm:$0xf]
  %v19 = vld [vmem:[%s1] sm:$0xf]
  %v20 = vld [vmem:[%s1 + $0x4] sm:$0xf]
  %v21 = vld [vmem:[%s1 + $0x8] sm:$0xf]
  %v22 = vld [vmem:[%s1 + $0xc] sm:$0xf]
  %v23 = vld [vmem:[%s1 + $0x10] sm:$0xf]
  %v24 = vld [vmem:[%s1 + $0x14] sm:$0xf]
  %v25 = vld [vmem:[%s1 + $0x18] sm:$0xf]
  %v26 = vld [vmem:[%s1 + $0x1c] sm:$0xf]
  %v27 = vld [vmem:[%s1 + $0x20] sm:$0xf]
  %v28 = vld [vmem:[%s1 + $0x24] sm:$0xf]
  %v29 = vld [vmem:[%s2] sm:$0x1]
  %v31 = vlaneseq
  %v32 = vshrl.u32 %v31, 7
  %v33 = vsub.s32 0, %v32
  %v34 = vrot.slane %v29, %v33
  %v40 = vunpack.c.l.b16 %v15
  %v41 = vunpack.c.l.b16 %v16
  %v42 = vunpack.c.l.b16 %v17
  %v43 = vunpack.c.l.b16 %v18
  %v44 = vpack.c.b16 %v41, %v40
  %v45 = vpack.c.b16 %v43, %v42
  %v56 = vunpack.c.l.b16 %v19
  %v57 = vunpack.c.l.b16 %v20
  %v58 = vunpack.c.l.b16 %v21
  %v59 = vunpack.c.l.b16 %v22
  %v60 = vunpack.c.l.b16 %v23
  %v61 = vunpack.c.l.b16 %v24
  %v62 = vunpack.c.l.b16 %v25
  %v63 = vunpack.c.l.b16 %v26
  %v64 = vunpack.c.l.b16 %v27
  %v65 = vunpack.c.l.b16 %v28
  %v66 = vpack.c.b16 %v57, %v56
  %v67 = vpack.c.b16 %v59, %v58
  %v68 = vpack.c.b16 %v61, %v60
  %v69 = vpack.c.b16 %v63, %v62
  %v70 = vpack.c.b16 %v65, %v64
  %vm76 = vcmask 654336
  %v78 = vsel %vm76, %v44, 0
  %v81 = vsel %vm76, %v45, 0
  %83 = vmatprep.subr.bf16.mxu0 0
  %84 = vmatpush1.bf16.msra.mxu0 0
  %85 = vmatprep.subr.bf16.mxu0 0
  %86 = vmatpush1.bf16.msra.mxu0 0
  %87 = vmatprep.subr.bf16.mxu0 0
  %88 = vmatpush1.bf16.msra.mxu0 0
  %89 = vmatprep.subr.bf16.mxu0 0
  %90 = vmatpush1.bf16.msra.mxu0 %v70
  %91 = vmatprep.subr.bf16.mxu0 0
  %92 = vmatpush1.bf16.msra.mxu0 %v69
  %93 = vmatprep.subr.bf16.mxu0 0
  %94 = vmatpush1.bf16.msra.mxu0 %v68
  %95 = vmatprep.subr.bf16.mxu0 0
  %96 = vmatpush1.bf16.msra.mxu0 %v67
  %97 = vmatprep.subr.bf16.mxu0 0
  %98 = vmatpush1.bf16.msra.mxu0 %v66
  %99 = vmatprep.subr.bf16.mxu0 0
  %100 = vmatpush2.bf16.msra.mxu0 0
  %101 = vmatprep.subr.bf16.mxu0 0
  %102 = vmatpush2.bf16.msra.mxu0 0
  %103 = vmatprep.subr.bf16.mxu0 0
  %104 = vmatpush2.bf16.msra.mxu0 0
  %105 = vmatprep.subr.bf16.mxu0 0
  %106 = vmatpush2.bf16.msra.mxu0 0
  %107 = vmatprep.subr.bf16.mxu0 0
  %108 = vmatpush2.bf16.msra.mxu0 0
  %109 = vmatprep.subr.bf16.mxu0 0
  %110 = vmatpush2.bf16.msra.mxu0 0
  %111 = vmatprep.subr.bf16.mxu0 0
  %112 = vmatpush2.bf16.msra.mxu0 0
  %113 = vmatprep.subr.bf16.mxu0 0
  %114 = vmatpush2.bf16.msra.mxu0 0
  %115 = vmatprep.mubr.bf16.mxu0 0
  %116 = vmatmul.mubr.bf16.gmra.mxu0 %v78
  %v117 = vpop.f32.mrf.mxu0
  %v118 = vadd.f32 %v34, %v117
  %v119 = vpop.f32.mrf.mxu0
  %v120 = vpop.f32.mrf.mxu0
  %v121 = vadd.f32 %v34, %v120
  %v122 = vpop.f32.mrf.mxu0
  %123 = vmatprep.mubr.bf16.mxu0 0
  %124 = vmatmul.mubr.bf16.gmra.mxu0 %v81
  %v125 = vpop.f32.mrf.mxu0
  %v126 = vadd.f32 %v34, %v125
  %v127 = vpop.f32.mrf.mxu0
  %v128 = vpop.f32.mrf.mxu0
  %v129 = vadd.f32 %v34, %v128
  %v130 = vpop.f32.mrf.mxu0
  %131 = vdwg.mxu0
  %v132 = vmax.f32 %v118, 0.0
  %v133 = vmax.f32 %v121, 0.0
  %v134 = vmax.f32 %v126, 0.0
  %v135 = vmax.f32 %v129, 0.0
  %136 = vst [vmem:[%s3] sm:$0xff] %v132
  %137 = vst [vmem:[%s3 + $0x8] sm:$0xff] %v133
  %138 = vst [vmem:[%s3 + $0x10] sm:$0xff] %v134
  %139 = vst [vmem:[%s3 + $0x18] sm:$0xff] %v135
  // Predicated region
  $region14: #{timm_model_forward.4} parent=0 // pred_check
    _
  $region15: #{timm_model_forward.4} parent=0 // pred_check_branch
    %141 = sbr.rel (0) target = $region17
  $region16: #{timm_model_forward.4} parent=0 // pred_region
    _
  $region17: #{timm_model_forward.4} parent=0 // pred_fallthru
    _
  // Predicated region
  $region18: #{timm_model_forward.4} parent=0 // pred_check
    _
  $region19: #{timm_model_forward.4} parent=0 // pred_check_branch
    %143 = sbr.rel (0) target = $region21
  $region20: #{timm_model_forward.4} parent=0 // pred_region
    _
  $region21: #{timm_model_forward.4} parent=0 // pred_fallthru
    _

// kernel: timm_model_forward.5
$region0: #{timm_model_forward.5}
  #allocation0 [shape = 'u32[]', space=smem, size = 0x4, offset = 0x4, fixed_abs, tag = 'smem constant byte address 0x4 - core index']
  #allocation1 [shape = 'u32[144,128]{1,0:T(1,128)}', space=vmem, size = 0x12000, scoped, tag = 'internal scratch']
  %s0 = inlined_call_operand.vmem [shape: bf16[8,144], index: 0, kind: input, shape index: {}]
  %s1 = inlined_call_operand.vmem [shape: bf16[144,128], index: 1, kind: input, shape index: {}]
  %s2 = inlined_call_operand.vmem [shape: f32[1,128], index: 2, kind: input, shape index: {}]
  %s3 = inlined_call_operand.hbm [shape: f32[8,128], index: 3, kind: output, shape index: {}]
  %s4 = sld [smem:[#allocation0]]
  $region22: #{timm_model_forward.5} parent=0
    _
  %s6 = ssub.s32 1, %s4
  %s7 = scalar_select 0, %s6, %s4
  $region1: #{timm_model_forward.5} parent=0
    #allocation2 [shape = 'u8[4096]{0}', space=vmem, size = 0x1000, scoped, tag = 'output window, operand 0, single buffered']
    #allocation3 [shape = 's32[1]{0}', space=sflag, size = 0x4, scoped, tag = 'scoped memory for timm_model_forward.5']
    %8 = vsyncpa [#allocation3], 0
    // Predicated region
    $region2: #{timm_model_forward.5} parent=1 // pred_check
      _
    $region3: #{timm_model_forward.5} parent=1 // pred_check_branch
      %10 = sbr.rel (0) target = $region5
    $region4: #{timm_model_forward.5} parent=1 // pred_region
      _
    $region5: #{timm_model_forward.5} parent=1 // pred_fallthru
      _
    // Predicated region
    $region6: #{timm_model_forward.5} parent=1 // pred_check
      _
    $region7: #{timm_model_forward.5} parent=1 // pred_check_branch
      %12 = sbr.rel (0) target = $region9
    $region8: #{timm_model_forward.5} parent=1 // pred_region
      _
    $region9: #{timm_model_forward.5} parent=1 // pred_fallthru
      _
    // Predicated region
    $region10: #{timm_model_forward.5} parent=1 // pred_check
      _
    $region11: #{timm_model_forward.5} parent=1 // pred_check_branch
      %14 = sbr.rel (0) target = $region13
    $region12: #{timm_model_forward.5} parent=1 // pred_region
      _
    $region13: #{timm_model_forward.5} parent=1 // pred_fallthru
      _
    %v16 = vld [vmem:[%s0] sm:$0xff]
    %v17 = vld [vmem:[%s1] sm:$0xf]
    %v18 = vld [vmem:[%s1 + $0x4] sm:$0xf]
    %v19 = vld [vmem:[%s1 + $0x8] sm:$0xf]
    %v20 = vld [vmem:[%s1 + $0xc] sm:$0xf]
    %v21 = vld [vmem:[%s1 + $0x10] sm:$0xf]
    %v22 = vld [vmem:[%s1 + $0x14] sm:$0xf]
    %v23 = vld [vmem:[%s1 + $0x18] sm:$0xf]
    %v24 = vld [vmem:[%s1 + $0x1c] sm:$0xf]
    %v25 = vld [vmem:[%s1 + $0x20] sm:$0xf]
    %v26 = vld [vmem:[%s1 + $0x24] sm:$0xf]
    %v27 = vld [vmem:[%s1 + $0x28] sm:$0xf]
    %v28 = vld [vmem:[%s1 + $0x2c] sm:$0xf]
    %v29 = vld [vmem:[%s1 + $0x30] sm:$0xf]
    %v30 = vld [vmem:[%s1 + $0x34] sm:$0xf]
    %v31 = vld [vmem:[%s1 + $0x38] sm:$0xf]
    %v32 = vld [vmem:[%s1 + $0x3c] sm:$0xf]
    %v33 = vld [vmem:[%s1 + $0x40] sm:$0xf]
    %v34 = vld [vmem:[%s1 + $0x44] sm:$0xf]
    %v35 = vld [vmem:[%s2] sm:$0x1]
    %v37 = vlaneseq
    %v38 = vshrl.u32 %v37, 7
    %v39 = vsub.s32 0, %v38
    %v40 = vrot.slane %v35, %v39
    %v43 = vunpack.c.l.b16 %v16
    %v44 = vunpack.c.h.b16 %v16
    %v45 = vpack.c.b16 %v43, %v43
    %v46 = vpack.c.b16 %v44, %v44
    %v66 = vunpack.c.l.b16 %v17
    %v67 = vunpack.c.l.b16 %v18
    %v68 = vunpack.c.l.b16 %v19
    %v69 = vunpack.c.l.b16 %v20
    %v70 = vunpack.c.l.b16 %v21
    %v71 = vunpack.c.l.b16 %v22
    %v72 = vunpack.c.l.b16 %v23
    %v73 = vunpack.c.l.b16 %v24
    %v74 = vunpack.c.l.b16 %v25
    %v75 = vunpack.c.l.b16 %v26
    %v76 = vunpack.c.l.b16 %v27
    %v77 = vunpack.c.l.b16 %v28
    %v78 = vunpack.c.l.b16 %v29
    %v79 = vunpack.c.l.b16 %v30
    %v80 = vunpack.c.l.b16 %v31
    %v81 = vunpack.c.l.b16 %v32
    %v82 = vunpack.c.l.b16 %v33
    %v83 = vunpack.c.l.b16 %v34
    %v84 = vpack.c.b16 %v67, %v66
    %v85 = vpack.c.b16 %v69, %v68
    %v86 = vpack.c.b16 %v71, %v70
    %v87 = vpack.c.b16 %v73, %v72
    %v88 = vpack.c.b16 %v75, %v74
    %v89 = vpack.c.b16 %v77, %v76
    %v90 = vpack.c.b16 %v79, %v78
    %v91 = vpack.c.b16 %v81, %v80
    %v92 = vpack.c.b16 %v83, %v82
    %vm102 = vcmask 130048
    %v104 = vsel %vm102, %v46, 0
    %106 = vmatprep.subr.bf16.mxu0 0
    %107 = vmatpush1.bf16.msra.mxu0 %v91
    %108 = vmatprep.subr.bf16.mxu0 0
    %109 = vmatpush1.bf16.msra.mxu0 %v90
    %110 = vmatprep.subr.bf16.mxu0 0
    %111 = vmatpush1.bf16.msra.mxu0 %v89
    %112 = vmatprep.subr.bf16.mxu0 0
    %113 = vmatpush1.bf16.msra.mxu0 %v88
    %114 = vmatprep.subr.bf16.mxu0 0
    %115 = vmatpush1.bf16.msra.mxu0 %v87
    %116 = vmatprep.subr.bf16.mxu0 0
    %117 = vmatpush1.bf16.msra.mxu0 %v86
    %118 = vmatprep.subr.bf16.mxu0 0
    %119 = vmatpush1.bf16.msra.mxu0 %v85
    %120 = vmatprep.subr.bf16.mxu0 0
    %121 = vmatpush1.bf16.msra.mxu0 %v84
    %122 = vmatprep.subr.bf16.mxu0 0
    %123 = vmatpush2.bf16.msra.mxu0 0
    %124 = vmatprep.subr.bf16.mxu0 0
    %125 = vmatpush2.bf16.msra.mxu0 0
    %126 = vmatprep.subr.bf16.mxu0 0
    %127 = vmatpush2.bf16.msra.mxu0 0
    %128 = vmatprep.subr.bf16.mxu0 0
    %129 = vmatpush2.bf16.msra.mxu0 0
    %130 = vmatprep.subr.bf16.mxu0 0
    %131 = vmatpush2.bf16.msra.mxu0 0
    %132 = vmatprep.subr.bf16.mxu0 0
    %133 = vmatpush2.bf16.msra.mxu0 0
    %134 = vmatprep.subr.bf16.mxu0 0
    %135 = vmatpush2.bf16.msra.mxu0 0
    %136 = vmatprep.subr.bf16.mxu0 0
    %137 = vmatpush2.bf16.msra.mxu0 %v92
    %138 = vmatprep.mubr.bf16.mxu0 %v104
    %139 = vmatmul.mubr.bf16.gmra.mxu0 %v45
    %v140 = vpop.f32.mrf.mxu0
    %v141 = vadd.f32 %v40, %v140
    %v142 = vpop.f32.mrf.mxu0
    %v143 = vpop.f32.mrf.mxu0
    %v144 = vpop.f32.mrf.mxu0
    %145 = vdwg.mxu0
    %v146 = vmax.f32 %v141, 0.0
    %147 = vst [vmem:[#allocation2] sm:$0xff] %v146
    // Predicated region
    $region14: #{timm_model_forward.5} parent=1 // pred_check
      _
    $region15: #{timm_model_forward.5} parent=1 // pred_check_branch
      %149 = sbr.rel (0) target = $region17
    $region16: #{timm_model_forward.5} parent=1 // pred_region
      %s151 = ssub.s32 128, 128
      %152 = vsyncadd [#allocation3], %s151
      %s154 = sshll.u32 [#allocation2], 4
      %s155 = int_to_ptr.vmem [resolvable:$true] %s154
      %157 = dma.vmem_to_hbm [thread:$0]  %s155, 128, %s3, [#allocation3]
    $region17: #{timm_model_forward.5} parent=1 // pred_fallthru
      _
    // Predicated region
    $region18: #{timm_model_forward.5} parent=1 // pred_check
      _
    $region19: #{timm_model_forward.5} parent=1 // pred_check_branch
      %159 = sbr.rel (0) target = $region21
    $region20: #{timm_model_forward.5} parent=1 // pred_region
      %160 = dma.done [#allocation3], 128
    $region21: #{timm_model_forward.5} parent=1 // pred_fallthru
      _
    %161 = vsyncpa [#allocation3], 1

</llo_original>
